<compile_context>
chip_gen: v7x
topology: tpu7x:2x2x1
jax: 0.10.0
libtpu: 0.0.40
codegen_flags: <defaults>
</compile_context>

<pallas_src>
import functools

import jax
import jax.numpy as jnp
import numpy as np
from jax import lax
from jax.experimental import pallas as pl
from jax.experimental.pallas import tpu as pltpu  # noqa: F401  (kept for TPU-specific extensions)


def _round8(n: int) -> int:
    return ((n + 7) // 8) * 8


def _pack_offsets(input_size: int, hidden_size: int):
    """Row offsets of each parameter inside the packed (ROWS, 4H) buffer.

    Every section starts at a multiple of 8 so all in-kernel slices are
    sublane aligned.  fc2_w is padded to 4H rows so the fc2 matmul takes the
    full-width z1 tile without any lane slicing.
    """
    H, I = hidden_size, input_size
    off = {}
    off["w_hh"] = 0                                   # (H, 4H)
    off["w_ih"] = _round8(H)                          # (I, 4H), padded rows
    off["b"] = off["w_ih"] + _round8(I)               # (1, 4H)
    off["fc1_w"] = off["b"] + 8                       # (H, 4H), cols>=H/2 zero
    off["fc1_b"] = off["fc1_w"] + _round8(H)          # (1, 4H), cols>=H/2 zero
    off["fc2_w"] = off["fc1_b"] + 8                   # (4H, 4H), mostly zero
    off["fc2_b"] = off["fc2_w"] + _round8(4 * H)      # (1, 4H), cols>=O zero
    off["rows"] = off["fc2_b"] + 8
    return off


def prepare_params(w_ih, w_hh, b_ih, b_hh, fc1_w, fc1_b, fc2_w, fc2_b):
    """One-time parameter preparation (do this at init, NOT per call).

    - transposes all weights (kernel never transposes),
    - scales the i/f/o gate columns by 0.5 (sigmoid computed as 0.5*tanh+0.5),
    - zero-pads and packs everything into one (ROWS, 4H) float32 buffer so the
      kernel needs a single parameter DMA.
    """
    H = w_hh.shape[1]
    I = w_ih.shape[1]
    H2 = fc1_w.shape[0]
    O = fc2_w.shape[0]
    FH = 4 * H
    off = _pack_offsets(I, H)

    # Gate order [i, f, g, o]: scale i/f/o by 0.5, leave g untouched.
    gate_scale = jnp.concatenate([
        jnp.full((H,), 0.5, jnp.float32),
        jnp.full((H,), 0.5, jnp.float32),
        jnp.ones((H,), jnp.float32),
        jnp.full((H,), 0.5, jnp.float32),
    ])

    w_ih_t = w_ih.astype(jnp.float32).T * gate_scale            # (I, 4H)
    w_hh_t = w_hh.astype(jnp.float32).T * gate_scale            # (H, 4H)
    b = (b_ih + b_hh).astype(jnp.float32) * gate_scale          # (4H,)

    pack = jnp.zeros((off["rows"], FH), jnp.float32)
    pack = pack.at[off["w_hh"]:off["w_hh"] + H, :].set(w_hh_t)
    pack = pack.at[off["w_ih"]:off["w_ih"] + I, :].set(w_ih_t)
    pack = pack.at[off["b"], :].set(b)
    pack = pack.at[off["fc1_w"]:off["fc1_w"] + H, :H2].set(fc1_w.astype(jnp.float32).T)
    pack = pack.at[off["fc1_b"], :H2].set(fc1_b.astype(jnp.float32))
    pack = pack.at[off["fc2_w"]:off["fc2_w"] + H2, :O].set(fc2_w.astype(jnp.float32).T)
    pack = pack.at[off["fc2_b"], :O].set(fc2_b.astype(jnp.float32))
    return pack


def _lstm_fc_kernel(x_ref, p_ref, out_ref, *, T, B, I, H, off):
    # x_ref: (T*B, I) flattened seq-major input
    # p_ref: (ROWS, 4H) packed parameters (see _pack_offsets)
    # out_ref: (B, 4H) lane-dense output; cols >= output_size are exactly zero
    FH = 4 * H

    w_hh = p_ref[off["w_hh"]:off["w_hh"] + H, :]        # (H, 4H)
    w_ih = p_ref[off["w_ih"]:off["w_ih"] + I, :]        # (I, 4H)
    b = p_ref[off["b"]:off["b"] + 1, :]                 # (1, 4H)

    # Hoisted input projection for ALL timesteps: one MXU matmul + one bias add.
    xg = jnp.dot(x_ref[...], w_ih, preferred_element_type=jnp.float32) + b   # (T*B, 4H)
    # Hoist per-step slices out of the recurrence so any sublane work overlaps
    # the serial MXU chain instead of sitting on it.
    xg_t = [xg[t * B:(t + 1) * B, :] for t in range(T)]

    half = jnp.float32(0.5)

    def gates_to_hc(tg, c_prev, with_forget):
        # i/f/o columns were pre-scaled by 0.5 -> sigmoid(z) = 0.5*tanh(z/2)+0.5
        i_g = half * tg[:, 0 * H:1 * H] + half
        g_g = tg[:, 2 * H:3 * H]                        # g column unscaled -> tanh
        o_g = half * tg[:, 3 * H:4 * H] + half
        if with_forget:
            f_g = half * tg[:, 1 * H:2 * H] + half
            c = f_g * c_prev + i_g * g_g
        else:                                           # t = 0: c_prev == 0
            c = i_g * g_g
        h = o_g * jnp.tanh(c)
        return h, c

    # t = 0 peeled: h = c = 0, so no h @ w_hh matmul and no forget-gate fma.
    h, c = gates_to_hc(jnp.tanh(xg_t[0]), None, False)

    # T is static and tiny -> fully unrolled straight-line recurrence.
    for t in range(1, T):
        gates = xg_t[t] + jnp.dot(h, w_hh, preferred_element_type=jnp.float32)
        h, c = gates_to_hc(jnp.tanh(gates), c, True)

    # FC head: fc1 -> ReLU -> fc2, fused.  All fc weights/biases are zero-padded
    # to 4H lanes, so z1 and the final store are full-width (lane-dense vst).
    fc1_w = p_ref[off["fc1_w"]:off["fc1_w"] + H, :]     # (H, 4H)
    fc1_b = p_ref[off["fc1_b"]:off["fc1_b"] + 1, :]     # (1, 4H)
    fc2_w = p_ref[off["fc2_w"]:off["fc2_w"] + FH, :]    # (4H, 4H)
    fc2_b = p_ref[off["fc2_b"]:off["fc2_b"] + 1, :]     # (1, 4H)

    z1 = jnp.maximum(
        jnp.dot(h, fc1_w, preferred_element_type=jnp.float32) + fc1_b, 0.0)   # (B, 4H)
    out_ref[...] = (jnp.dot(z1, fc2_w, preferred_element_type=jnp.float32)
                    + fc2_b)


def rnn_predictor_forward(x, packed_params, *, hidden_size, output_size):
    """x: (T, B, input_size) float32 seq-major.  Returns (B, output_size) float32."""
    T, B, I = x.shape
    H = hidden_size
    FH = 4 * H
    off = _pack_offsets(I, H)
    x2d = x.reshape(T * B, I).astype(jnp.float32)       # free reshape

    kernel = functools.partial(_lstm_fc_kernel, T=T, B=B, I=I, H=H, off=off)
    out_full = pl.pallas_call(
        kernel,
        out_shape=jax.ShapeDtypeStruct((B, FH), jnp.float32),
        in_specs=[pl.BlockSpec(x2d.shape, lambda: (0, 0)),
                  pl.BlockSpec(packed_params.shape, lambda: (0, 0))],
        out_specs=pl.BlockSpec((B, FH), lambda: (0, 0)),
    )(x2d, packed_params)
    # Columns beyond output_size are exactly zero by construction.
    return out_full[:, :output_size]


def _reference_forward(x, raw_params):
    """Pure-JAX reference mirroring PyTorch nn.LSTM + fc1/ReLU/fc2 (unscaled params)."""
    w_ih, w_hh, b_ih, b_hh, fc1_w, fc1_b, fc2_w, fc2_b = raw_params
    B = x.shape[1]
    H = w_hh.shape[1]
    b = b_ih + b_hh

    def step(carry, x_t):
        h, c = carry
        gates = x_t @ w_ih.T + h @ w_hh.T + b
        i = jax.nn.sigmoid(gates[:, 0 * H:1 * H])
        f = jax.nn.sigmoid(gates[:, 1 * H:2 * H])
        g = jnp.tanh(gates[:, 2 * H:3 * H])
        o = jax.nn.sigmoid(gates[:, 3 * H:4 * H])
        c = f * c + i * g
        h = o * jnp.tanh(c)
        return (h, c), None

    init = (jnp.zeros((B, H), jnp.float32), jnp.zeros((B, H), jnp.float32))
    (h, _), _ = lax.scan(step, init, x)
    z = jnp.maximum(h @ fc1_w.T + fc1_b, 0.0)
    return z @ fc2_w.T + fc2_b


if __name__ == "__main__":
    # Small shapes consistent with the module: seq=8, batch=8 (fills vreg
    # sublanes / MXU rows), input=4, hidden=32, output=4.
    T, B, I, H, O = 8, 8, 4, 32, 4
    key = jax.random.PRNGKey(0)
    keys = jax.random.split(key, 9)
    s = 1.0 / np.sqrt(H)  # PyTorch-style uniform(-1/sqrt(H), 1/sqrt(H)) init

    w_ih = jax.random.uniform(keys[0], (4 * H, I), jnp.float32, -s, s)
    w_hh = jax.random.uniform(keys[1], (4 * H, H), jnp.float32, -s, s)
    b_ih = jax.random.uniform(keys[2], (4 * H,), jnp.float32, -s, s)
    b_hh = jax.random.uniform(keys[3], (4 * H,), jnp.float32, -s, s)
    fc1_w = jax.random.uniform(keys[4], (H // 2, H), jnp.float32, -s, s)
    fc1_b = jax.random.uniform(keys[5], (H // 2,), jnp.float32, -s, s)
    fc2_w = jax.random.uniform(keys[6], (O, H // 2), jnp.float32, -s, s)
    fc2_b = jax.random.uniform(keys[7], (O,), jnp.float32, -s, s)
    x = jax.random.normal(keys[8], (T, B, I), jnp.float32)

    # One-time parameter prep (transpose + gate scaling + packing) — init cost only.
    packed = jax.block_until_ready(
        prepare_params(w_ih, w_hh, b_ih, b_hh, fc1_w, fc1_b, fc2_w, fc2_b))

    out = jax.block_until_ready(
        rnn_predictor_forward(x, packed, hidden_size=H, output_size=O))
    ref = jax.block_until_ready(_reference_forward(
        x, (w_ih, w_hh, b_ih, b_hh, fc1_w, fc1_b, fc2_w, fc2_b)))

    if not np.allclose(np.asarray(out), np.asarray(ref), atol=1e-5, rtol=1e-5):
        raise AssertionError("Pallas LSTM output mismatch vs reference")

    print("KERNEL_OK")
</pallas_src>

<mosaic_0001>
module attributes {stable_mosaic.version = 11 : i64} {
  func.func @_lstm_fc_kernel(%arg0: memref<64x4xf32, #tpu.memory_space<vmem>>, %arg1: memref<224x128xf32, #tpu.memory_space<vmem>>, %arg2: memref<8x128xf32, #tpu.memory_space<vmem>>) attributes {dimension_semantics = [], scalar_prefetch = 0 : i64, scratch_operands = 0 : i64, tpu.core_type = #tpu.core_type<tc>} {
    %c0 = arith.constant 0 : index
    %c0_0 = arith.constant 0 : index
    %0 = vector.load %arg1[%c0, %c0_0] : memref<224x128xf32, #tpu.memory_space<vmem>>, vector<32x128xf32>
    %c32 = arith.constant 32 : index
    %c0_1 = arith.constant 0 : index
    %1 = vector.load %arg1[%c32, %c0_1] : memref<224x128xf32, #tpu.memory_space<vmem>>, vector<4x128xf32>
    %c40 = arith.constant 40 : index
    %c0_2 = arith.constant 0 : index
    %2 = vector.load %arg1[%c40, %c0_2] : memref<224x128xf32, #tpu.memory_space<vmem>>, vector<1x128xf32>
    %c0_3 = arith.constant 0 : index
    %c0_4 = arith.constant 0 : index
    %3 = vector.load %arg0[%c0_3, %c0_4] : memref<64x4xf32, #tpu.memory_space<vmem>>, vector<64x4xf32>
    %cst = arith.constant dense<0.000000e+00> : vector<64x128xf32>
    %4 = tpu.matmul %3, %1, %cst {dimension_numbers = #tpu.dot_dimension_numbers<[1], [0], [0], [1], [0, 0, 1, 1], [], []>} : vector<64x4xf32>, vector<4x128xf32>, vector<64x128xf32> -> vector<64x128xf32>
    %5 = vector.broadcast %2 : vector<1x128xf32> to vector<64x128xf32>
    %6 = arith.addf %4, %5 : vector<64x128xf32>
    %7 = vector.extract_strided_slice %6 {offsets = [0, 0], sizes = [8, 128], strides = [1, 1]} : vector<64x128xf32> to vector<8x128xf32>
    %8 = vector.extract_strided_slice %6 {offsets = [8, 0], sizes = [8, 128], strides = [1, 1]} : vector<64x128xf32> to vector<8x128xf32>
    %9 = vector.extract_strided_slice %6 {offsets = [16, 0], sizes = [8, 128], strides = [1, 1]} : vector<64x128xf32> to vector<8x128xf32>
    %10 = vector.extract_strided_slice %6 {offsets = [24, 0], sizes = [8, 128], strides = [1, 1]} : vector<64x128xf32> to vector<8x128xf32>
    %11 = vector.extract_strided_slice %6 {offsets = [32, 0], sizes = [8, 128], strides = [1, 1]} : vector<64x128xf32> to vector<8x128xf32>
    %12 = vector.extract_strided_slice %6 {offsets = [40, 0], sizes = [8, 128], strides = [1, 1]} : vector<64x128xf32> to vector<8x128xf32>
    %13 = vector.extract_strided_slice %6 {offsets = [48, 0], sizes = [8, 128], strides = [1, 1]} : vector<64x128xf32> to vector<8x128xf32>
    %14 = vector.extract_strided_slice %6 {offsets = [56, 0], sizes = [8, 128], strides = [1, 1]} : vector<64x128xf32> to vector<8x128xf32>
    %15 = math.tanh %7 : vector<8x128xf32>
    %16 = vector.extract_strided_slice %15 {offsets = [0, 0], sizes = [8, 32], strides = [1, 1]} : vector<8x128xf32> to vector<8x32xf32>
    %cst_5 = arith.constant 5.000000e-01 : f32
    %17 = vector.broadcast %cst_5 : f32 to vector<8x32xf32>
    %18 = arith.mulf %17, %16 : vector<8x32xf32>
    %cst_6 = arith.constant 5.000000e-01 : f32
    %19 = vector.broadcast %cst_6 : f32 to vector<8x32xf32>
    %20 = arith.addf %18, %19 : vector<8x32xf32>
    %21 = vector.extract_strided_slice %15 {offsets = [0, 64], sizes = [8, 32], strides = [1, 1]} : vector<8x128xf32> to vector<8x32xf32>
    %22 = vector.extract_strided_slice %15 {offsets = [0, 96], sizes = [8, 32], strides = [1, 1]} : vector<8x128xf32> to vector<8x32xf32>
    %cst_7 = arith.constant 5.000000e-01 : f32
    %23 = vector.broadcast %cst_7 : f32 to vector<8x32xf32>
    %24 = arith.mulf %23, %22 : vector<8x32xf32>
    %cst_8 = arith.constant 5.000000e-01 : f32
    %25 = vector.broadcast %cst_8 : f32 to vector<8x32xf32>
    %26 = arith.addf %24, %25 : vector<8x32xf32>
    %27 = arith.mulf %20, %21 : vector<8x32xf32>
    %28 = math.tanh %27 : vector<8x32xf32>
    %29 = arith.mulf %26, %28 : vector<8x32xf32>
    %cst_9 = arith.constant dense<0.000000e+00> : vector<8x128xf32>
    %30 = tpu.matmul %29, %0, %cst_9 {dimension_numbers = #tpu.dot_dimension_numbers<[1], [0], [0], [1], [0, 0, 1, 1], [], []>} : vector<8x32xf32>, vector<32x128xf32>, vector<8x128xf32> -> vector<8x128xf32>
    %31 = arith.addf %8, %30 : vector<8x128xf32>
    %32 = math.tanh %31 : vector<8x128xf32>
    %33 = vector.extract_strided_slice %32 {offsets = [0, 0], sizes = [8, 32], strides = [1, 1]} : vector<8x128xf32> to vector<8x32xf32>
    %cst_10 = arith.constant 5.000000e-01 : f32
    %34 = vector.broadcast %cst_10 : f32 to vector<8x32xf32>
    %35 = arith.mulf %34, %33 : vector<8x32xf32>
    %cst_11 = arith.constant 5.000000e-01 : f32
    %36 = vector.broadcast %cst_11 : f32 to vector<8x32xf32>
    %37 = arith.addf %35, %36 : vector<8x32xf32>
    %38 = vector.extract_strided_slice %32 {offsets = [0, 64], sizes = [8, 32], strides = [1, 1]} : vector<8x128xf32> to vector<8x32xf32>
    %39 = vector.extract_strided_slice %32 {offsets = [0, 96], sizes = [8, 32], strides = [1, 1]} : vector<8x128xf32> to vector<8x32xf32>
    %cst_12 = arith.constant 5.000000e-01 : f32
    %40 = vector.broadcast %cst_12 : f32 to vector<8x32xf32>
    %41 = arith.mulf %40, %39 : vector<8x32xf32>
    %cst_13 = arith.constant 5.000000e-01 : f32
    %42 = vector.broadcast %cst_13 : f32 to vector<8x32xf32>
    %43 = arith.addf %41, %42 : vector<8x32xf32>
    %44 = vector.extract_strided_slice %32 {offsets = [0, 32], sizes = [8, 32], strides = [1, 1]} : vector<8x128xf32> to vector<8x32xf32>
    %cst_14 = arith.constant 5.000000e-01 : f32
    %45 = vector.broadcast %cst_14 : f32 to vector<8x32xf32>
    %46 = arith.mulf %45, %44 : vector<8x32xf32>
    %cst_15 = arith.constant 5.000000e-01 : f32
    %47 = vector.broadcast %cst_15 : f32 to vector<8x32xf32>
    %48 = arith.addf %46, %47 : vector<8x32xf32>
    %49 = arith.mulf %48, %27 : vector<8x32xf32>
    %50 = arith.mulf %37, %38 : vector<8x32xf32>
    %51 = arith.addf %49, %50 : vector<8x32xf32>
    %52 = math.tanh %51 : vector<8x32xf32>
    %53 = arith.mulf %43, %52 : vector<8x32xf32>
    %cst_16 = arith.constant dense<0.000000e+00> : vector<8x128xf32>
    %54 = tpu.matmul %53, %0, %cst_16 {dimension_numbers = #tpu.dot_dimension_numbers<[1], [0], [0], [1], [0, 0, 1, 1], [], []>} : vector<8x32xf32>, vector<32x128xf32>, vector<8x128xf32> -> vector<8x128xf32>
    %55 = arith.addf %9, %54 : vector<8x128xf32>
    %56 = math.tanh %55 : vector<8x128xf32>
    %57 = vector.extract_strided_slice %56 {offsets = [0, 0], sizes = [8, 32], strides = [1, 1]} : vector<8x128xf32> to vector<8x32xf32>
    %cst_17 = arith.constant 5.000000e-01 : f32
    %58 = vector.broadcast %cst_17 : f32 to vector<8x32xf32>
    %59 = arith.mulf %58, %57 : vector<8x32xf32>
    %cst_18 = arith.constant 5.000000e-01 : f32
    %60 = vector.broadcast %cst_18 : f32 to vector<8x32xf32>
    %61 = arith.addf %59, %60 : vector<8x32xf32>
    %62 = vector.extract_strided_slice %56 {offsets = [0, 64], sizes = [8, 32], strides = [1, 1]} : vector<8x128xf32> to vector<8x32xf32>
    %63 = vector.extract_strided_slice %56 {offsets = [0, 96], sizes = [8, 32], strides = [1, 1]} : vector<8x128xf32> to vector<8x32xf32>
    %cst_19 = arith.constant 5.000000e-01 : f32
    %64 = vector.broadcast %cst_19 : f32 to vector<8x32xf32>
    %65 = arith.mulf %64, %63 : vector<8x32xf32>
    %cst_20 = arith.constant 5.000000e-01 : f32
    %66 = vector.broadcast %cst_20 : f32 to vector<8x32xf32>
    %67 = arith.addf %65, %66 : vector<8x32xf32>
    %68 = vector.extract_strided_slice %56 {offsets = [0, 32], sizes = [8, 32], strides = [1, 1]} : vector<8x128xf32> to vector<8x32xf32>
    %cst_21 = arith.constant 5.000000e-01 : f32
    %69 = vector.broadcast %cst_21 : f32 to vector<8x32xf32>
    %70 = arith.mulf %69, %68 : vector<8x32xf32>
    %cst_22 = arith.constant 5.000000e-01 : f32
    %71 = vector.broadcast %cst_22 : f32 to vector<8x32xf32>
    %72 = arith.addf %70, %71 : vector<8x32xf32>
    %73 = arith.mulf %72, %51 : vector<8x32xf32>
    %74 = arith.mulf %61, %62 : vector<8x32xf32>
    %75 = arith.addf %73, %74 : vector<8x32xf32>
    %76 = math.tanh %75 : vector<8x32xf32>
    %77 = arith.mulf %67, %76 : vector<8x32xf32>
    %cst_23 = arith.constant dense<0.000000e+00> : vector<8x128xf32>
    %78 = tpu.matmul %77, %0, %cst_23 {dimension_numbers = #tpu.dot_dimension_numbers<[1], [0], [0], [1], [0, 0, 1, 1], [], []>} : vector<8x32xf32>, vector<32x128xf32>, vector<8x128xf32> -> vector<8x128xf32>
    %79 = arith.addf %10, %78 : vector<8x128xf32>
    %80 = math.tanh %79 : vector<8x128xf32>
    %81 = vector.extract_strided_slice %80 {offsets = [0, 0], sizes = [8, 32], strides = [1, 1]} : vector<8x128xf32> to vector<8x32xf32>
    %cst_24 = arith.constant 5.000000e-01 : f32
    %82 = vector.broadcast %cst_24 : f32 to vector<8x32xf32>
    %83 = arith.mulf %82, %81 : vector<8x32xf32>
    %cst_25 = arith.constant 5.000000e-01 : f32
    %84 = vector.broadcast %cst_25 : f32 to vector<8x32xf32>
    %85 = arith.addf %83, %84 : vector<8x32xf32>
    %86 = vector.extract_strided_slice %80 {offsets = [0, 64], sizes = [8, 32], strides = [1, 1]} : vector<8x128xf32> to vector<8x32xf32>
    %87 = vector.extract_strided_slice %80 {offsets = [0, 96], sizes = [8, 32], strides = [1, 1]} : vector<8x128xf32> to vector<8x32xf32>
    %cst_26 = arith.constant 5.000000e-01 : f32
    %88 = vector.broadcast %cst_26 : f32 to vector<8x32xf32>
    %89 = arith.mulf %88, %87 : vector<8x32xf32>
    %cst_27 = arith.constant 5.000000e-01 : f32
    %90 = vector.broadcast %cst_27 : f32 to vector<8x32xf32>
    %91 = arith.addf %89, %90 : vector<8x32xf32>
    %92 = vector.extract_strided_slice %80 {offsets = [0, 32], sizes = [8, 32], strides = [1, 1]} : vector<8x128xf32> to vector<8x32xf32>
    %cst_28 = arith.constant 5.000000e-01 : f32
    %93 = vector.broadcast %cst_28 : f32 to vector<8x32xf32>
    %94 = arith.mulf %93, %92 : vector<8x32xf32>
    %cst_29 = arith.constant 5.000000e-01 : f32
    %95 = vector.broadcast %cst_29 : f32 to vector<8x32xf32>
    %96 = arith.addf %94, %95 : vector<8x32xf32>
    %97 = arith.mulf %96, %75 : vector<8x32xf32>
    %98 = arith.mulf %85, %86 : vector<8x32xf32>
    %99 = arith.addf %97, %98 : vector<8x32xf32>
    %100 = math.tanh %99 : vector<8x32xf32>
    %101 = arith.mulf %91, %100 : vector<8x32xf32>
    %cst_30 = arith.constant dense<0.000000e+00> : vector<8x128xf32>
    %102 = tpu.matmul %101, %0, %cst_30 {dimension_numbers = #tpu.dot_dimension_numbers<[1], [0], [0], [1], [0, 0, 1, 1], [], []>} : vector<8x32xf32>, vector<32x128xf32>, vector<8x128xf32> -> vector<8x128xf32>
    %103 = arith.addf %11, %102 : vector<8x128xf32>
    %104 = math.tanh %103 : vector<8x128xf32>
    %105 = vector.extract_strided_slice %104 {offsets = [0, 0], sizes = [8, 32], strides = [1, 1]} : vector<8x128xf32> to vector<8x32xf32>
    %cst_31 = arith.constant 5.000000e-01 : f32
    %106 = vector.broadcast %cst_31 : f32 to vector<8x32xf32>
    %107 = arith.mulf %106, %105 : vector<8x32xf32>
    %cst_32 = arith.constant 5.000000e-01 : f32
    %108 = vector.broadcast %cst_32 : f32 to vector<8x32xf32>
    %109 = arith.addf %107, %108 : vector<8x32xf32>
    %110 = vector.extract_strided_slice %104 {offsets = [0, 64], sizes = [8, 32], strides = [1, 1]} : vector<8x128xf32> to vector<8x32xf32>
    %111 = vector.extract_strided_slice %104 {offsets = [0, 96], sizes = [8, 32], strides = [1, 1]} : vector<8x128xf32> to vector<8x32xf32>
    %cst_33 = arith.constant 5.000000e-01 : f32
    %112 = vector.broadcast %cst_33 : f32 to vector<8x32xf32>
    %113 = arith.mulf %112, %111 : vector<8x32xf32>
    %cst_34 = arith.constant 5.000000e-01 : f32
    %114 = vector.broadcast %cst_34 : f32 to vector<8x32xf32>
    %115 = arith.addf %113, %114 : vector<8x32xf32>
    %116 = vector.extract_strided_slice %104 {offsets = [0, 32], sizes = [8, 32], strides = [1, 1]} : vector<8x128xf32> to vector<8x32xf32>
    %cst_35 = arith.constant 5.000000e-01 : f32
    %117 = vector.broadcast %cst_35 : f32 to vector<8x32xf32>
    %118 = arith.mulf %117, %116 : vector<8x32xf32>
    %cst_36 = arith.constant 5.000000e-01 : f32
    %119 = vector.broadcast %cst_36 : f32 to vector<8x32xf32>
    %120 = arith.addf %118, %119 : vector<8x32xf32>
    %121 = arith.mulf %120, %99 : vector<8x32xf32>
    %122 = arith.mulf %109, %110 : vector<8x32xf32>
    %123 = arith.addf %121, %122 : vector<8x32xf32>
    %124 = math.tanh %123 : vector<8x32xf32>
    %125 = arith.mulf %115, %124 : vector<8x32xf32>
    %cst_37 = arith.constant dense<0.000000e+00> : vector<8x128xf32>
    %126 = tpu.matmul %125, %0, %cst_37 {dimension_numbers = #tpu.dot_dimension_numbers<[1], [0], [0], [1], [0, 0, 1, 1], [], []>} : vector<8x32xf32>, vector<32x128xf32>, vector<8x128xf32> -> vector<8x128xf32>
    %127 = arith.addf %12, %126 : vector<8x128xf32>
    %128 = math.tanh %127 : vector<8x128xf32>
    %129 = vector.extract_strided_slice %128 {offsets = [0, 0], sizes = [8, 32], strides = [1, 1]} : vector<8x128xf32> to vector<8x32xf32>
    %cst_38 = arith.constant 5.000000e-01 : f32
    %130 = vector.broadcast %cst_38 : f32 to vector<8x32xf32>
    %131 = arith.mulf %130, %129 : vector<8x32xf32>
    %cst_39 = arith.constant 5.000000e-01 : f32
    %132 = vector.broadcast %cst_39 : f32 to vector<8x32xf32>
    %133 = arith.addf %131, %132 : vector<8x32xf32>
    %134 = vector.extract_strided_slice %128 {offsets = [0, 64], sizes = [8, 32], strides = [1, 1]} : vector<8x128xf32> to vector<8x32xf32>
    %135 = vector.extract_strided_slice %128 {offsets = [0, 96], sizes = [8, 32], strides = [1, 1]} : vector<8x128xf32> to vector<8x32xf32>
    %cst_40 = arith.constant 5.000000e-01 : f32
    %136 = vector.broadcast %cst_40 : f32 to vector<8x32xf32>
    %137 = arith.mulf %136, %135 : vector<8x32xf32>
    %cst_41 = arith.constant 5.000000e-01 : f32
    %138 = vector.broadcast %cst_41 : f32 to vector<8x32xf32>
    %139 = arith.addf %137, %138 : vector<8x32xf32>
    %140 = vector.extract_strided_slice %128 {offsets = [0, 32], sizes = [8, 32], strides = [1, 1]} : vector<8x128xf32> to vector<8x32xf32>
    %cst_42 = arith.constant 5.000000e-01 : f32
    %141 = vector.broadcast %cst_42 : f32 to vector<8x32xf32>
    %142 = arith.mulf %141, %140 : vector<8x32xf32>
    %cst_43 = arith.constant 5.000000e-01 : f32
    %143 = vector.broadcast %cst_43 : f32 to vector<8x32xf32>
    %144 = arith.addf %142, %143 : vector<8x32xf32>
    %145 = arith.mulf %144, %123 : vector<8x32xf32>
    %146 = arith.mulf %133, %134 : vector<8x32xf32>
    %147 = arith.addf %145, %146 : vector<8x32xf32>
    %148 = math.tanh %147 : vector<8x32xf32>
    %149 = arith.mulf %139, %148 : vector<8x32xf32>
    %cst_44 = arith.constant dense<0.000000e+00> : vector<8x128xf32>
    %150 = tpu.matmul %149, %0, %cst_44 {dimension_numbers = #tpu.dot_dimension_numbers<[1], [0], [0], [1], [0, 0, 1, 1], [], []>} : vector<8x32xf32>, vector<32x128xf32>, vector<8x128xf32> -> vector<8x128xf32>
    %151 = arith.addf %13, %150 : vector<8x128xf32>
    %152 = math.tanh %151 : vector<8x128xf32>
    %153 = vector.extract_strided_slice %152 {offsets = [0, 0], sizes = [8, 32], strides = [1, 1]} : vector<8x128xf32> to vector<8x32xf32>
    %cst_45 = arith.constant 5.000000e-01 : f32
    %154 = vector.broadcast %cst_45 : f32 to vector<8x32xf32>
    %155 = arith.mulf %154, %153 : vector<8x32xf32>
    %cst_46 = arith.constant 5.000000e-01 : f32
    %156 = vector.broadcast %cst_46 : f32 to vector<8x32xf32>
    %157 = arith.addf %155, %156 : vector<8x32xf32>
    %158 = vector.extract_strided_slice %152 {offsets = [0, 64], sizes = [8, 32], strides = [1, 1]} : vector<8x128xf32> to vector<8x32xf32>
    %159 = vector.extract_strided_slice %152 {offsets = [0, 96], sizes = [8, 32], strides = [1, 1]} : vector<8x128xf32> to vector<8x32xf32>
    %cst_47 = arith.constant 5.000000e-01 : f32
    %160 = vector.broadcast %cst_47 : f32 to vector<8x32xf32>
    %161 = arith.mulf %160, %159 : vector<8x32xf32>
    %cst_48 = arith.constant 5.000000e-01 : f32
    %162 = vector.broadcast %cst_48 : f32 to vector<8x32xf32>
    %163 = arith.addf %161, %162 : vector<8x32xf32>
    %164 = vector.extract_strided_slice %152 {offsets = [0, 32], sizes = [8, 32], strides = [1, 1]} : vector<8x128xf32> to vector<8x32xf32>
    %cst_49 = arith.constant 5.000000e-01 : f32
    %165 = vector.broadcast %cst_49 : f32 to vector<8x32xf32>
    %166 = arith.mulf %165, %164 : vector<8x32xf32>
    %cst_50 = arith.constant 5.000000e-01 : f32
    %167 = vector.broadcast %cst_50 : f32 to vector<8x32xf32>
    %168 = arith.addf %166, %167 : vector<8x32xf32>
    %169 = arith.mulf %168, %147 : vector<8x32xf32>
    %170 = arith.mulf %157, %158 : vector<8x32xf32>
    %171 = arith.addf %169, %170 : vector<8x32xf32>
    %172 = math.tanh %171 : vector<8x32xf32>
    %173 = arith.mulf %163, %172 : vector<8x32xf32>
    %cst_51 = arith.constant dense<0.000000e+00> : vector<8x128xf32>
    %174 = tpu.matmul %173, %0, %cst_51 {dimension_numbers = #tpu.dot_dimension_numbers<[1], [0], [0], [1], [0, 0, 1, 1], [], []>} : vector<8x32xf32>, vector<32x128xf32>, vector<8x128xf32> -> vector<8x128xf32>
    %175 = arith.addf %14, %174 : vector<8x128xf32>
    %176 = math.tanh %175 : vector<8x128xf32>
    %177 = vector.extract_strided_slice %176 {offsets = [0, 0], sizes = [8, 32], strides = [1, 1]} : vector<8x128xf32> to vector<8x32xf32>
    %cst_52 = arith.constant 5.000000e-01 : f32
    %178 = vector.broadcast %cst_52 : f32 to vector<8x32xf32>
    %179 = arith.mulf %178, %177 : vector<8x32xf32>
    %cst_53 = arith.constant 5.000000e-01 : f32
    %180 = vector.broadcast %cst_53 : f32 to vector<8x32xf32>
    %181 = arith.addf %179, %180 : vector<8x32xf32>
    %182 = vector.extract_strided_slice %176 {offsets = [0, 64], sizes = [8, 32], strides = [1, 1]} : vector<8x128xf32> to vector<8x32xf32>
    %183 = vector.extract_strided_slice %176 {offsets = [0, 96], sizes = [8, 32], strides = [1, 1]} : vector<8x128xf32> to vector<8x32xf32>
    %cst_54 = arith.constant 5.000000e-01 : f32
    %184 = vector.broadcast %cst_54 : f32 to vector<8x32xf32>
    %185 = arith.mulf %184, %183 : vector<8x32xf32>
    %cst_55 = arith.constant 5.000000e-01 : f32
    %186 = vector.broadcast %cst_55 : f32 to vector<8x32xf32>
    %187 = arith.addf %185, %186 : vector<8x32xf32>
    %188 = vector.extract_strided_slice %176 {offsets = [0, 32], sizes = [8, 32], strides = [1, 1]} : vector<8x128xf32> to vector<8x32xf32>
    %cst_56 = arith.constant 5.000000e-01 : f32
    %189 = vector.broadcast %cst_56 : f32 to vector<8x32xf32>
    %190 = arith.mulf %189, %188 : vector<8x32xf32>
    %cst_57 = arith.constant 5.000000e-01 : f32
    %191 = vector.broadcast %cst_57 : f32 to vector<8x32xf32>
    %192 = arith.addf %190, %191 : vector<8x32xf32>
    %193 = arith.mulf %192, %171 : vector<8x32xf32>
    %194 = arith.mulf %181, %182 : vector<8x32xf32>
    %195 = arith.addf %193, %194 : vector<8x32xf32>
    %196 = math.tanh %195 : vector<8x32xf32>
    %197 = arith.mulf %187, %196 : vector<8x32xf32>
    %c48 = arith.constant 48 : index
    %c0_58 = arith.constant 0 : index
    %198 = vector.load %arg1[%c48, %c0_58] : memref<224x128xf32, #tpu.memory_space<vmem>>, vector<32x128xf32>
    %c80 = arith.constant 80 : index
    %c0_59 = arith.constant 0 : index
    %199 = vector.load %arg1[%c80, %c0_59] : memref<224x128xf32, #tpu.memory_space<vmem>>, vector<1x128xf32>
    %c88 = arith.constant 88 : index
    %c0_60 = arith.constant 0 : index
    %200 = vector.load %arg1[%c88, %c0_60] : memref<224x128xf32, #tpu.memory_space<vmem>>, vector<128x128xf32>
    %c216 = arith.constant 216 : index
    %c0_61 = arith.constant 0 : index
    %201 = vector.load %arg1[%c216, %c0_61] : memref<224x128xf32, #tpu.memory_space<vmem>>, vector<1x128xf32>
    %cst_62 = arith.constant dense<0.000000e+00> : vector<8x128xf32>
    %202 = tpu.matmul %197, %198, %cst_62 {dimension_numbers = #tpu.dot_dimension_numbers<[1], [0], [0], [1], [0, 0, 1, 1], [], []>} : vector<8x32xf32>, vector<32x128xf32>, vector<8x128xf32> -> vector<8x128xf32>
    %203 = vector.broadcast %199 : vector<1x128xf32> to vector<8x128xf32>
    %204 = arith.addf %202, %203 : vector<8x128xf32>
    %cst_63 = arith.constant 0.000000e+00 : f32
    %205 = vector.broadcast %cst_63 : f32 to vector<8x128xf32>
    %206 = arith.maximumf %204, %205 : vector<8x128xf32>
    %cst_64 = arith.constant dense<0.000000e+00> : vector<8x128xf32>
    %207 = tpu.matmul %206, %200, %cst_64 {dimension_numbers = #tpu.dot_dimension_numbers<[1], [0], [0], [1], [0, 0, 1, 1], [], []>} : vector<8x128xf32>, vector<128x128xf32>, vector<8x128xf32> -> vector<8x128xf32>
    %208 = vector.broadcast %201 : vector<1x128xf32> to vector<8x128xf32>
    %209 = arith.addf %207, %208 : vector<8x128xf32>
    %c0_65 = arith.constant 0 : index
    %c0_66 = arith.constant 0 : index
    %210 = vector.load %arg2[%c0_65, %c0_66] : memref<8x128xf32, #tpu.memory_space<vmem>>, vector<8x128xf32>
    tpu.vector_store %arg2[%c0_65, %c0_66], %209 {strides = array<i32>} : memref<8x128xf32, #tpu.memory_space<vmem>>, vector<8x128xf32>,
    return
  }
}

</mosaic_0001>

<llo_original>
// kernel: tpu_custom_call.1
$region0: #{tpu_custom_call.1}
  #allocation0 [shape = 'u32[]', space=smem, size = 0x4, offset = 0x4, fixed_abs, tag = 'smem constant byte address 0x4 - core index']
  #allocation1 [shape = 'u32[144,128]{1,0:T(1,128)}', space=vmem, size = 0x12000, scoped, tag = 'internal scratch']
  %s0 = inlined_call_operand.vmem [shape: f32[64,4], index: 0, kind: input, shape index: {}]
  %s1 = inlined_call_operand.hbm [shape: f32[224,128], index: 1, kind: input, shape index: {}]
  %s2 = inlined_call_operand.hbm [shape: f32[8,128], index: 2, kind: output, shape index: {}]
  %s3 = sld [smem:[#allocation0]]
  $region22: #{tpu_custom_call.1} parent=0
    _
  %s5 = ssub.s32 1, %s3
  %s6 = scalar_select 0, %s5, %s3
  $region1: #{tpu_custom_call.1} parent=0
    #allocation2 [shape = 'u8[114688]{0}', space=vmem, size = 0x1c000, scoped, tag = 'input window, operand 1, single buffered']
    #allocation3 [shape = 's32[1]{0}', space=sflag, size = 0x4, scoped, tag = 'scoped memory for tpu_custom_call.1']
    #allocation4 [shape = 's32[1]{0}', space=sflag, size = 0x4, scoped, tag = 'scoped memory for tpu_custom_call.1']
    #allocation5 [shape = 'u8[4096]{0}', space=vmem, size = 0x1000, scoped, tag = 'output window, operand 0, single buffered']
    %7 = vsyncpa [#allocation3], 0
    %8 = vsyncpa [#allocation4], 0
    // Predicated region
    $region2: #{tpu_custom_call.1} parent=1 // pred_check
      _
    $region3: #{tpu_custom_call.1} parent=1 // pred_check_branch
      %10 = sbr.rel (0) target = $region5
    $region4: #{tpu_custom_call.1} parent=1 // pred_region
      _
    $region5: #{tpu_custom_call.1} parent=1 // pred_fallthru
      _
    // Predicated region
    $region6: #{tpu_custom_call.1} parent=1 // pred_check
      _
    $region7: #{tpu_custom_call.1} parent=1 // pred_check_branch
      %12 = sbr.rel (0) target = $region9
    $region8: #{tpu_custom_call.1} parent=1 // pred_region
      %s14 = ssub.s32 3584, 3584
      %15 = vsyncadd [#allocation3], %s14
      %s16 = sshll.u32 [#allocation2], 4
      %s17 = int_to_ptr.vmem [resolvable:$true] %s16
      %22 = dma.hbm_to_vmem [thread:$0]  %s1, 3584, %s17, [#allocation3], 128, 128, 8
    $region9: #{tpu_custom_call.1} parent=1 // pred_fallthru
      _
    // Predicated region
    $region10: #{tpu_custom_call.1} parent=1 // pred_check
      _
    $region11: #{tpu_custom_call.1} parent=1 // pred_check_branch
      %24 = sbr.rel (0) target = $region13
    $region12: #{tpu_custom_call.1} parent=1 // pred_region
      %25 = dma.done [#allocation3], 3584
    $region13: #{tpu_custom_call.1} parent=1 // pred_fallthru
      _
    %v26 = vld [vmem:[#allocation2] sm:$0xff]
    %v27 = vld [vmem:[#allocation2 + $0x8] sm:$0xff]
    %v28 = vld [vmem:[#allocation2 + $0x10] sm:$0xff]
    %v29 = vld [vmem:[#allocation2 + $0x18] sm:$0xff]
    %v30 = vld [vmem:[#allocation2 + $0x20] sm:$0xf]
    %v31 = vld [vmem:[#allocation2 + $0x28] sm:$0x1]
    %v32 = vld [vmem:[%s0] sm:$0xff]
    %v33 = vld [vmem:[%s0 + $0x8] sm:$0xff]
    %v34 = vld [vmem:[%s0 + $0x10] sm:$0xff]
    %v35 = vld [vmem:[%s0 + $0x18] sm:$0xff]
    %v36 = vld [vmem:[%s0 + $0x20] sm:$0xff]
    %v37 = vld [vmem:[%s0 + $0x28] sm:$0xff]
    %v38 = vld [vmem:[%s0 + $0x30] sm:$0xff]
    %v39 = vld [vmem:[%s0 + $0x38] sm:$0xff]
    %v40 = vlaneseq
    %v41 = vshrl.u32 %v40, 7
    %v42 = vsub.s32 0, %v41
    %v43 = vrot.slane %v31, %v42
    %vm44 = vcmask 31744
    %v46 = vsel %vm44, %v32, 0
    %v49 = vsel %vm44, %v33, 0
    %v52 = vsel %vm44, %v34, 0
    %v55 = vsel %vm44, %v35, 0
    %v58 = vsel %vm44, %v36, 0
    %v61 = vsel %vm44, %v37, 0
    %v64 = vsel %vm44, %v38, 0
    %v67 = vsel %vm44, %v39, 0
    %vm69 = vcmask 1043456
    %v71 = vsel %vm69, %v30, 0
    %73 = vmatprep.subr.mxu0 0.0
    %74 = vmatpush1.msra.mxu0 %v71
    %75 = vmatprep.subr.mxu0 0.0
    %76 = vmatpush1.msra.mxu0 0.0
    %77 = vmatprep.subr.mxu0 0.0
    %78 = vmatpush1.msra.mxu0 0.0
    %79 = vmatprep.subr.mxu0 0.0
    %80 = vmatpush1.msra.mxu0 0.0
    %81 = vmatprep.subr.mxu0 0.0
    %82 = vmatpush1.msra.mxu0 0.0
    %83 = vmatprep.subr.mxu0 0.0
    %84 = vmatpush1.msra.mxu0 0.0
    %85 = vmatprep.subr.mxu0 0.0
    %86 = vmatpush1.msra.mxu0 0.0
    %87 = vmatprep.subr.mxu0 0.0
    %88 = vmatpush1.msra.mxu0 0.0
    %89 = vmatprep.subr.mxu0 0.0
    %90 = vmatpush1.msra.mxu0 0.0
    %91 = vmatprep.subr.mxu0 0.0
    %92 = vmatpush1.msra.mxu0 0.0
    %93 = vmatprep.subr.mxu0 0.0
    %94 = vmatpush1.msra.mxu0 0.0
    %95 = vmatprep.subr.mxu0 0.0
    %96 = vmatpush1.msra.mxu0 0.0
    %97 = vmatprep.subr.mxu0 0.0
    %98 = vmatpush1.msra.mxu0 0.0
    %99 = vmatprep.subr.mxu0 0.0
    %100 = vmatpush1.msra.mxu0 0.0
    %101 = vmatprep.subr.mxu0 0.0
    %102 = vmatpush1.msra.mxu0 0.0
    %103 = vmatprep.subr.mxu0 0.0
    %104 = vmatpush1.msra.mxu0 0.0
    %105 = vmatprep.subr.mxu0 0.0
    %106 = vmatpush1.msra.mxu0 0.0
    %107 = vmatprep.subr.mxu0 0.0
    %108 = vmatpush1.msra.mxu0 0.0
    %109 = vmatprep.subr.mxu0 0.0
    %110 = vmatpush1.msra.mxu0 0.0
    %111 = vmatprep.subr.mxu0 0.0
    %112 = vmatpush1.msra.mxu0 0.0
    %113 = vmatprep.subr.mxu0 0.0
    %114 = vmatpush1.msra.mxu0 0.0
    %115 = vmatprep.subr.mxu0 0.0
    %116 = vmatpush1.msra.mxu0 0.0
    %117 = vmatprep.subr.mxu0 0.0
    %118 = vmatpush1.msra.mxu0 0.0
    %119 = vmatprep.subr.mxu0 0.0
    %120 = vmatpush1.msra.mxu0 0.0
    %121 = vmatprep.subr.mxu0 0.0
    %122 = vmatpush1.msra.mxu0 0.0
    %123 = vmatprep.subr.mxu0 0.0
    %124 = vmatpush1.msra.mxu0 0.0
    %125 = vmatprep.subr.mxu0 0.0
    %126 = vmatpush1.msra.mxu0 0.0
    %127 = vmatprep.subr.mxu0 0.0
    %128 = vmatpush1.msra.mxu0 0.0
    %129 = vmatprep.subr.mxu0 0.0
    %130 = vmatpush1.msra.mxu0 0.0
    %131 = vmatprep.subr.mxu0 0.0
    %132 = vmatpush1.msra.mxu0 0.0
    %133 = vmatprep.subr.mxu0 0.0
    %134 = vmatpush1.msra.mxu0 0.0
    %135 = vmatprep.subr.mxu0 0.0
    %136 = vmatpush1.msra.mxu0 0.0
    %137 = vmatprep.mubr.f32.mxu0 0.0
    %138 = vmatmul.mubr.f32.gmra.mrb[0].mxu0 %v46
    %v139 = vpop.f32.mrb[0].mxu0
    %v140 = vadd.f32 %v43, %v139
    %v141 = vpop.f32.mrb[0].mxu0
    %142 = vmatprep.mubr.f32.mxu0 0.0
    %143 = vmatmul.mubr.f32.gmra.mrb[0].mxu0 %v49
    %v144 = vpop.f32.mrb[0].mxu0
    %v145 = vadd.f32 %v43, %v144
    %v146 = vpop.f32.mrb[0].mxu0
    %147 = vmatprep.mubr.f32.mxu0 0.0
    %148 = vmatmul.mubr.f32.gmra.mrb[0].mxu0 %v52
    %v149 = vpop.f32.mrb[0].mxu0
    %v150 = vadd.f32 %v43, %v149
    %v151 = vpop.f32.mrb[0].mxu0
    %152 = vmatprep.mubr.f32.mxu0 0.0
    %153 = vmatmul.mubr.f32.gmra.mrb[0].mxu0 %v55
    %v154 = vpop.f32.mrb[0].mxu0
    %v155 = vadd.f32 %v43, %v154
    %v156 = vpop.f32.mrb[0].mxu0
    %157 = vmatprep.mubr.f32.mxu0 0.0
    %158 = vmatmul.mubr.f32.gmra.mrb[0].mxu0 %v58
    %v159 = vpop.f32.mrb[0].mxu0
    %v160 = vadd.f32 %v43, %v159
    %v161 = vpop.f32.mrb[0].mxu0
    %162 = vmatprep.mubr.f32.mxu0 0.0
    %163 = vmatmul.mubr.f32.gmra.mrb[0].mxu0 %v61
    %v164 = vpop.f32.mrb[0].mxu0
    %v165 = vadd.f32 %v43, %v164
    %v166 = vpop.f32.mrb[0].mxu0
    %167 = vmatprep.mubr.f32.mxu0 0.0
    %168 = vmatmul.mubr.f32.gmra.mrb[0].mxu0 %v64
    %v169 = vpop.f32.mrb[0].mxu0
    %v170 = vadd.f32 %v43, %v169
    %v171 = vpop.f32.mrb[0].mxu0
    %172 = vmatprep.mubr.f32.mxu0 0.0
    %173 = vmatmul.mubr.f32.gmra.mrb[0].mxu0 %v67
    %v174 = vpop.f32.mrb[0].mxu0
    %v175 = vadd.f32 %v43, %v174
    %v176 = vpop.f32.mrb[0].mxu0
    %177 = vdwg.mxu0
    %v178 = vtanh.pop %v140
    %v179 = vmul.f32 %v178, 0.5
    %v180 = vadd.f32 %v179, 0.5
    %182 = vrot.lane.b32.xlu0 %v178, 64
    %v183 = vpop.permute.xlu0 %182
    %v185 = vmul.f32 %v180, %v183
    %v186 = vtanh.pop %v185
    %188 = vrot.lane.b32.xlu0 %v186, 96
    %v189 = vpop.permute.xlu0 %188
    %v191 = vmul.f32 %v180, %v189
    %193 = vrot.lane.b32.xlu0 %v191, 32
    %v194 = vpop.permute.xlu0 %193
    %vm195 = vcmask 261120
    %v196 = vsel %vm195, %v194, 0
    %198 = vmatprep.subr.mxu0 0.0
    %199 = vmatpush1.msra.mxu0 %v26
    %200 = vmatprep.subr.mxu0 0.0
    %201 = vmatpush1.msra.mxu0 %v27
    %202 = vmatprep.subr.mxu0 0.0
    %203 = vmatpush1.msra.mxu0 %v28
    %204 = vmatprep.subr.mxu0 0.0
    %205 = vmatpush1.msra.mxu0 %v29
    %206 = vmatprep.subr.mxu0 0.0
    %207 = vmatpush1.msra.mxu0 0.0
    %208 = vmatprep.subr.mxu0 0.0
    %209 = vmatpush1.msra.mxu0 0.0
    %210 = vmatprep.subr.mxu0 0.0
    %211 = vmatpush1.msra.mxu0 0.0
    %212 = vmatprep.subr.mxu0 0.0
    %213 = vmatpush1.msra.mxu0 0.0
    %214 = vmatprep.subr.mxu0 0.0
    %215 = vmatpush1.msra.mxu0 0.0
    %216 = vmatprep.subr.mxu0 0.0
    %217 = vmatpush1.msra.mxu0 0.0
    %218 = vmatprep.subr.mxu0 0.0
    %219 = vmatpush1.msra.mxu0 0.0
    %220 = vmatprep.subr.mxu0 0.0
    %221 = vmatpush1.msra.mxu0 0.0
    %222 = vmatprep.subr.mxu0 0.0
    %223 = vmatpush1.msra.mxu0 0.0
    %224 = vmatprep.subr.mxu0 0.0
    %225 = vmatpush1.msra.mxu0 0.0
    %226 = vmatprep.subr.mxu0 0.0
    %227 = vmatpush1.msra.mxu0 0.0
    %228 = vmatprep.subr.mxu0 0.0
    %229 = vmatpush1.msra.mxu0 0.0
    %230 = vmatprep.subr.mxu0 0.0
    %231 = vmatpush1.msra.mxu0 0.0
    %232 = vmatprep.subr.mxu0 0.0
    %233 = vmatpush1.msra.mxu0 0.0
    %234 = vmatprep.subr.mxu0 0.0
    %235 = vmatpush1.msra.mxu0 0.0
    %236 = vmatprep.subr.mxu0 0.0
    %237 = vmatpush1.msra.mxu0 0.0
    %238 = vmatprep.subr.mxu0 0.0
    %239 = vmatpush1.msra.mxu0 0.0
    %240 = vmatprep.subr.mxu0 0.0
    %241 = vmatpush1.msra.mxu0 0.0
    %242 = vmatprep.subr.mxu0 0.0
    %243 = vmatpush1.msra.mxu0 0.0
    %244 = vmatprep.subr.mxu0 0.0
    %245 = vmatpush1.msra.mxu0 0.0
    %246 = vmatprep.subr.mxu0 0.0
    %247 = vmatpush1.msra.mxu0 0.0
    %248 = vmatprep.subr.mxu0 0.0
    %249 = vmatpush1.msra.mxu0 0.0
    %250 = vmatprep.subr.mxu0 0.0
    %251 = vmatpush1.msra.mxu0 0.0
    %252 = vmatprep.subr.mxu0 0.0
    %253 = vmatpush1.msra.mxu0 0.0
    %254 = vmatprep.subr.mxu0 0.0
    %255 = vmatpush1.msra.mxu0 0.0
    %256 = vmatprep.subr.mxu0 0.0
    %257 = vmatpush1.msra.mxu0 0.0
    %258 = vmatprep.subr.mxu0 0.0
    %259 = vmatpush1.msra.mxu0 0.0
    %260 = vmatprep.subr.mxu0 0.0
    %261 = vmatpush1.msra.mxu0 0.0
    %262 = vmatprep.mubr.f32.mxu0 0.0
    %263 = vmatmul.mubr.f32.gmra.mrb[0].mxu0 %v196
    %v264 = vpop.f32.mrb[0].mxu0
    %v265 = vadd.f32 0.0, %v264
    %v266 = vpop.f32.mrb[0].mxu0
    %267 = vdwg.mxu0
    %v268 = vadd.f32 %v145, %v265
    %v269 = vtanh.pop %v268
    %v270 = vmul.f32 %v269, 0.5
    %v271 = vadd.f32 %v270, 0.5
    %273 = vrot.lane.b32.xlu0 %v185, 32
    %v274 = vpop.permute.xlu0 %273
    %v276 = vmul.f32 %v271, %v274
    %278 = vrot.lane.b32.xlu0 %v269, 64
    %v279 = vpop.permute.xlu0 %278
    %v281 = vmul.f32 %v271, %v279
    %283 = vrot.lane.b32.xlu0 %v281, 32
    %v284 = vpop.permute.xlu0 %283
    %v286 = vadd.f32 %v276, %v284
    %v287 = vtanh.pop %v286
    %289 = vrot.lane.b32.xlu0 %v287, 64
    %v290 = vpop.permute.xlu0 %289
    %v292 = vmul.f32 %v271, %v290
    %294 = vrot.lane.b32.xlu0 %v292, 32
    %v295 = vpop.permute.xlu0 %294
    %v296 = vsel %vm195, %v295, 0
    %298 = vmatprep.subr.mxu0 0.0
    %299 = vmatpush1.msra.mxu0 %v26
    %300 = vmatprep.subr.mxu0 0.0
    %301 = vmatpush1.msra.mxu0 %v27
    %302 = vmatprep.subr.mxu0 0.0
    %303 = vmatpush1.msra.mxu0 %v28
    %304 = vmatprep.subr.mxu0 0.0
    %305 = vmatpush1.msra.mxu0 %v29
    %306 = vmatprep.subr.mxu0 0.0
    %307 = vmatpush1.msra.mxu0 0.0
    %308 = vmatprep.subr.mxu0 0.0
    %309 = vmatpush1.msra.mxu0 0.0
    %310 = vmatprep.subr.mxu0 0.0
    %311 = vmatpush1.msra.mxu0 0.0
    %312 = vmatprep.subr.mxu0 0.0
    %313 = vmatpush1.msra.mxu0 0.0
    %314 = vmatprep.subr.mxu0 0.0
    %315 = vmatpush1.msra.mxu0 0.0
    %316 = vmatprep.subr.mxu0 0.0
    %317 = vmatpush1.msra.mxu0 0.0
    %318 = vmatprep.subr.mxu0 0.0
    %319 = vmatpush1.msra.mxu0 0.0
    %320 = vmatprep.subr.mxu0 0.0
    %321 = vmatpush1.msra.mxu0 0.0
    %322 = vmatprep.subr.mxu0 0.0
    %323 = vmatpush1.msra.mxu0 0.0
    %324 = vmatprep.subr.mxu0 0.0
    %325 = vmatpush1.msra.mxu0 0.0
    %326 = vmatprep.subr.mxu0 0.0
    %327 = vmatpush1.msra.mxu0 0.0
    %328 = vmatprep.subr.mxu0 0.0
    %329 = vmatpush1.msra.mxu0 0.0
    %330 = vmatprep.subr.mxu0 0.0
    %331 = vmatpush1.msra.mxu0 0.0
    %332 = vmatprep.subr.mxu0 0.0
    %333 = vmatpush1.msra.mxu0 0.0
    %334 = vmatprep.subr.mxu0 0.0
    %335 = vmatpush1.msra.mxu0 0.0
    %336 = vmatprep.subr.mxu0 0.0
    %337 = vmatpush1.msra.mxu0 0.0
    %338 = vmatprep.subr.mxu0 0.0
    %339 = vmatpush1.msra.mxu0 0.0
    %340 = vmatprep.subr.mxu0 0.0
    %341 = vmatpush1.msra.mxu0 0.0
    %342 = vmatprep.subr.mxu0 0.0
    %343 = vmatpush1.msra.mxu0 0.0
    %344 = vmatprep.subr.mxu0 0.0
    %345 = vmatpush1.msra.mxu0 0.0
    %346 = vmatprep.subr.mxu0 0.0
    %347 = vmatpush1.msra.mxu0 0.0
    %348 = vmatprep.subr.mxu0 0.0
    %349 = vmatpush1.msra.mxu0 0.0
    %350 = vmatprep.subr.mxu0 0.0
    %351 = vmatpush1.msra.mxu0 0.0
    %352 = vmatprep.subr.mxu0 0.0
    %353 = vmatpush1.msra.mxu0 0.0
    %354 = vmatprep.subr.mxu0 0.0
    %355 = vmatpush1.msra.mxu0 0.0
    %356 = vmatprep.subr.mxu0 0.0
    %357 = vmatpush1.msra.mxu0 0.0
    %358 = vmatprep.subr.mxu0 0.0
    %359 = vmatpush1.msra.mxu0 0.0
    %360 = vmatprep.subr.mxu0 0.0
    %361 = vmatpush1.msra.mxu0 0.0
    %362 = vmatprep.mubr.f32.mxu0 0.0
    %363 = vmatmul.mubr.f32.gmra.mrb[0].mxu0 %v296
    %v364 = vpop.f32.mrb[0].mxu0
    %v365 = vadd.f32 0.0, %v364
    %v366 = vpop.f32.mrb[0].mxu0
    %367 = vdwg.mxu0
    %v368 = vadd.f32 %v150, %v365
    %v369 = vtanh.pop %v368
    %v370 = vmul.f32 %v369, 0.5
    %v371 = vadd.f32 %v370, 0.5
    %v372 = vmul.f32 %v371, %v286
    %374 = vrot.lane.b32.xlu0 %v369, 64
    %v375 = vpop.permute.xlu0 %374
    %v377 = vmul.f32 %v371, %v375
    %379 = vrot.lane.b32.xlu0 %v377, 32
    %v380 = vpop.permute.xlu0 %379
    %v382 = vadd.f32 %v372, %v380
    %v383 = vtanh.pop %v382
    %385 = vrot.lane.b32.xlu0 %v383, 64
    %v386 = vpop.permute.xlu0 %385
    %v388 = vmul.f32 %v371, %v386
    %390 = vrot.lane.b32.xlu0 %v388, 32
    %v391 = vpop.permute.xlu0 %390
    %v392 = vsel %vm195, %v391, 0
    %394 = vmatprep.subr.mxu0 0.0
    %395 = vmatpush1.msra.mxu0 %v26
    %396 = vmatprep.subr.mxu0 0.0
    %397 = vmatpush1.msra.mxu0 %v27
    %398 = vmatprep.subr.mxu0 0.0
    %399 = vmatpush1.msra.mxu0 %v28
    %400 = vmatprep.subr.mxu0 0.0
    %401 = vmatpush1.msra.mxu0 %v29
    %402 = vmatprep.subr.mxu0 0.0
    %403 = vmatpush1.msra.mxu0 0.0
    %404 = vmatprep.subr.mxu0 0.0
    %405 = vmatpush1.msra.mxu0 0.0
    %406 = vmatprep.subr.mxu0 0.0
    %407 = vmatpush1.msra.mxu0 0.0
    %408 = vmatprep.subr.mxu0 0.0
    %409 = vmatpush1.msra.mxu0 0.0
    %410 = vmatprep.subr.mxu0 0.0
    %411 = vmatpush1.msra.mxu0 0.0
    %412 = vmatprep.subr.mxu0 0.0
    %413 = vmatpush1.msra.mxu0 0.0
    %414 = vmatprep.subr.mxu0 0.0
    %415 = vmatpush1.msra.mxu0 0.0
    %416 = vmatprep.subr.mxu0 0.0
    %417 = vmatpush1.msra.mxu0 0.0
    %418 = vmatprep.subr.mxu0 0.0
    %419 = vmatpush1.msra.mxu0 0.0
    %420 = vmatprep.subr.mxu0 0.0
    %421 = vmatpush1.msra.mxu0 0.0
    %422 = vmatprep.subr.mxu0 0.0
    %423 = vmatpush1.msra.mxu0 0.0
    %424 = vmatprep.subr.mxu0 0.0
    %425 = vmatpush1.msra.mxu0 0.0
    %426 = vmatprep.subr.mxu0 0.0
    %427 = vmatpush1.msra.mxu0 0.0
    %428 = vmatprep.subr.mxu0 0.0
    %429 = vmatpush1.msra.mxu0 0.0
    %430 = vmatprep.subr.mxu0 0.0
    %431 = vmatpush1.msra.mxu0 0.0
    %432 = vmatprep.subr.mxu0 0.0
    %433 = vmatpush1.msra.mxu0 0.0
    %434 = vmatprep.subr.mxu0 0.0
    %435 = vmatpush1.msra.mxu0 0.0
    %436 = vmatprep.subr.mxu0 0.0
    %437 = vmatpush1.msra.mxu0 0.0
    %438 = vmatprep.subr.mxu0 0.0
    %439 = vmatpush1.msra.mxu0 0.0
    %440 = vmatprep.subr.mxu0 0.0
    %441 = vmatpush1.msra.mxu0 0.0
    %442 = vmatprep.subr.mxu0 0.0
    %443 = vmatpush1.msra.mxu0 0.0
    %444 = vmatprep.subr.mxu0 0.0
    %445 = vmatpush1.msra.mxu0 0.0
    %446 = vmatprep.subr.mxu0 0.0
    %447 = vmatpush1.msra.mxu0 0.0
    %448 = vmatprep.subr.mxu0 0.0
    %449 = vmatpush1.msra.mxu0 0.0
    %450 = vmatprep.subr.mxu0 0.0
    %451 = vmatpush1.msra.mxu0 0.0
    %452 = vmatprep.subr.mxu0 0.0
    %453 = vmatpush1.msra.mxu0 0.0
    %454 = vmatprep.subr.mxu0 0.0
    %455 = vmatpush1.msra.mxu0 0.0
    %456 = vmatprep.subr.mxu0 0.0
    %457 = vmatpush1.msra.mxu0 0.0
    %458 = vmatprep.mubr.f32.mxu0 0.0
    %459 = vmatmul.mubr.f32.gmra.mrb[0].mxu0 %v392
    %v460 = vpop.f32.mrb[0].mxu0
    %v461 = vadd.f32 0.0, %v460
    %v462 = vpop.f32.mrb[0].mxu0
    %463 = vdwg.mxu0
    %v464 = vadd.f32 %v155, %v461
    %v465 = vtanh.pop %v464
    %v466 = vmul.f32 %v465, 0.5
    %v467 = vadd.f32 %v466, 0.5
    %v468 = vmul.f32 %v467, %v382
    %470 = vrot.lane.b32.xlu0 %v465, 64
    %v471 = vpop.permute.xlu0 %470
    %v473 = vmul.f32 %v467, %v471
    %475 = vrot.lane.b32.xlu0 %v473, 32
    %v476 = vpop.permute.xlu0 %475
    %v478 = vadd.f32 %v468, %v476
    %v479 = vtanh.pop %v478
    %481 = vrot.lane.b32.xlu0 %v479, 64
    %v482 = vpop.permute.xlu0 %481
    %v484 = vmul.f32 %v467, %v482
    %486 = vrot.lane.b32.xlu0 %v484, 32
    %v487 = vpop.permute.xlu0 %486
    %v488 = vsel %vm195, %v487, 0
    %490 = vmatprep.subr.mxu0 0.0
    %491 = vmatpush1.msra.mxu0 %v26
    %492 = vmatprep.subr.mxu0 0.0
    %493 = vmatpush1.msra.mxu0 %v27
    %494 = vmatprep.subr.mxu0 0.0
    %495 = vmatpush1.msra.mxu0 %v28
    %496 = vmatprep.subr.mxu0 0.0
    %497 = vmatpush1.msra.mxu0 %v29
    %498 = vmatprep.subr.mxu0 0.0
    %499 = vmatpush1.msra.mxu0 0.0
    %500 = vmatprep.subr.mxu0 0.0
    %501 = vmatpush1.msra.mxu0 0.0
    %502 = vmatprep.subr.mxu0 0.0
    %503 = vmatpush1.msra.mxu0 0.0
    %504 = vmatprep.subr.mxu0 0.0
    %505 = vmatpush1.msra.mxu0 0.0
    %506 = vmatprep.subr.mxu0 0.0
    %507 = vmatpush1.msra.mxu0 0.0
    %508 = vmatprep.subr.mxu0 0.0
    %509 = vmatpush1.msra.mxu0 0.0
    %510 = vmatprep.subr.mxu0 0.0
    %511 = vmatpush1.msra.mxu0 0.0
    %512 = vmatprep.subr.mxu0 0.0
    %513 = vmatpush1.msra.mxu0 0.0
    %514 = vmatprep.subr.mxu0 0.0
    %515 = vmatpush1.msra.mxu0 0.0
    %516 = vmatprep.subr.mxu0 0.0
    %517 = vmatpush1.msra.mxu0 0.0
    %518 = vmatprep.subr.mxu0 0.0
    %519 = vmatpush1.msra.mxu0 0.0
    %520 = vmatprep.subr.mxu0 0.0
    %521 = vmatpush1.msra.mxu0 0.0
    %522 = vmatprep.subr.mxu0 0.0
    %523 = vmatpush1.msra.mxu0 0.0
    %524 = vmatprep.subr.mxu0 0.0
    %525 = vmatpush1.msra.mxu0 0.0
    %526 = vmatprep.subr.mxu0 0.0
    %527 = vmatpush1.msra.mxu0 0.0
    %528 = vmatprep.subr.mxu0 0.0
    %529 = vmatpush1.msra.mxu0 0.0
    %530 = vmatprep.subr.mxu0 0.0
    %531 = vmatpush1.msra.mxu0 0.0
    %532 = vmatprep.subr.mxu0 0.0
    %533 = vmatpush1.msra.mxu0 0.0
    %534 = vmatprep.subr.mxu0 0.0
    %535 = vmatpush1.msra.mxu0 0.0
    %536 = vmatprep.subr.mxu0 0.0
    %537 = vmatpush1.msra.mxu0 0.0
    %538 = vmatprep.subr.mxu0 0.0
    %539 = vmatpush1.msra.mxu0 0.0
    %540 = vmatprep.subr.mxu0 0.0
    %541 = vmatpush1.msra.mxu0 0.0
    %542 = vmatprep.subr.mxu0 0.0
    %543 = vmatpush1.msra.mxu0 0.0
    %544 = vmatprep.subr.mxu0 0.0
    %545 = vmatpush1.msra.mxu0 0.0
    %546 = vmatprep.subr.mxu0 0.0
    %547 = vmatpush1.msra.mxu0 0.0
    %548 = vmatprep.subr.mxu0 0.0
    %549 = vmatpush1.msra.mxu0 0.0
    %550 = vmatprep.subr.mxu0 0.0
    %551 = vmatpush1.msra.mxu0 0.0
    %552 = vmatprep.subr.mxu0 0.0
    %553 = vmatpush1.msra.mxu0 0.0
    %554 = vmatprep.mubr.f32.mxu0 0.0
    %555 = vmatmul.mubr.f32.gmra.mrb[0].mxu0 %v488
    %v556 = vpop.f32.mrb[0].mxu0
    %v557 = vadd.f32 0.0, %v556
    %v558 = vpop.f32.mrb[0].mxu0
    %559 = vdwg.mxu0
    %v560 = vadd.f32 %v160, %v557
    %v561 = vtanh.pop %v560
    %v562 = vmul.f32 %v561, 0.5
    %v563 = vadd.f32 %v562, 0.5
    %v564 = vmul.f32 %v563, %v478
    %566 = vrot.lane.b32.xlu0 %v561, 64
    %v567 = vpop.permute.xlu0 %566
    %v569 = vmul.f32 %v563, %v567
    %571 = vrot.lane.b32.xlu0 %v569, 32
    %v572 = vpop.permute.xlu0 %571
    %v574 = vadd.f32 %v564, %v572
    %v575 = vtanh.pop %v574
    %577 = vrot.lane.b32.xlu0 %v575, 64
    %v578 = vpop.permute.xlu0 %577
    %v580 = vmul.f32 %v563, %v578
    %582 = vrot.lane.b32.xlu0 %v580, 32
    %v583 = vpop.permute.xlu0 %582
    %v584 = vsel %vm195, %v583, 0
    %586 = vmatprep.subr.mxu0 0.0
    %587 = vmatpush1.msra.mxu0 %v26
    %588 = vmatprep.subr.mxu0 0.0
    %589 = vmatpush1.msra.mxu0 %v27
    %590 = vmatprep.subr.mxu0 0.0
    %591 = vmatpush1.msra.mxu0 %v28
    %592 = vmatprep.subr.mxu0 0.0
    %593 = vmatpush1.msra.mxu0 %v29
    %594 = vmatprep.subr.mxu0 0.0
    %595 = vmatpush1.msra.mxu0 0.0
    %596 = vmatprep.subr.mxu0 0.0
    %597 = vmatpush1.msra.mxu0 0.0
    %598 = vmatprep.subr.mxu0 0.0
    %599 = vmatpush1.msra.mxu0 0.0
    %600 = vmatprep.subr.mxu0 0.0
    %601 = vmatpush1.msra.mxu0 0.0
    %602 = vmatprep.subr.mxu0 0.0
    %603 = vmatpush1.msra.mxu0 0.0
    %604 = vmatprep.subr.mxu0 0.0
    %605 = vmatpush1.msra.mxu0 0.0
    %606 = vmatprep.subr.mxu0 0.0
    %607 = vmatpush1.msra.mxu0 0.0
    %608 = vmatprep.subr.mxu0 0.0
    %609 = vmatpush1.msra.mxu0 0.0
    %610 = vmatprep.subr.mxu0 0.0
    %611 = vmatpush1.msra.mxu0 0.0
    %612 = vmatprep.subr.mxu0 0.0
    %613 = vmatpush1.msra.mxu0 0.0
    %614 = vmatprep.subr.mxu0 0.0
    %615 = vmatpush1.msra.mxu0 0.0
    %616 = vmatprep.subr.mxu0 0.0
    %617 = vmatpush1.msra.mxu0 0.0
    %618 = vmatprep.subr.mxu0 0.0
    %619 = vmatpush1.msra.mxu0 0.0
    %620 = vmatprep.subr.mxu0 0.0
    %621 = vmatpush1.msra.mxu0 0.0
    %622 = vmatprep.subr.mxu0 0.0
    %623 = vmatpush1.msra.mxu0 0.0
    %624 = vmatprep.subr.mxu0 0.0
    %625 = vmatpush1.msra.mxu0 0.0
    %626 = vmatprep.subr.mxu0 0.0
    %627 = vmatpush1.msra.mxu0 0.0
    %628 = vmatprep.subr.mxu0 0.0
    %629 = vmatpush1.msra.mxu0 0.0
    %630 = vmatprep.subr.mxu0 0.0
    %631 = vmatpush1.msra.mxu0 0.0
    %632 = vmatprep.subr.mxu0 0.0
    %633 = vmatpush1.msra.mxu0 0.0
    %634 = vmatprep.subr.mxu0 0.0
    %635 = vmatpush1.msra.mxu0 0.0
    %636 = vmatprep.subr.mxu0 0.0
    %637 = vmatpush1.msra.mxu0 0.0
    %638 = vmatprep.subr.mxu0 0.0
    %639 = vmatpush1.msra.mxu0 0.0
    %640 = vmatprep.subr.mxu0 0.0
    %641 = vmatpush1.msra.mxu0 0.0
    %642 = vmatprep.subr.mxu0 0.0
    %643 = vmatpush1.msra.mxu0 0.0
    %644 = vmatprep.subr.mxu0 0.0
    %645 = vmatpush1.msra.mxu0 0.0
    %646 = vmatprep.subr.mxu0 0.0
    %647 = vmatpush1.msra.mxu0 0.0
    %648 = vmatprep.subr.mxu0 0.0
    %649 = vmatpush1.msra.mxu0 0.0
    %650 = vmatprep.mubr.f32.mxu0 0.0
    %651 = vmatmul.mubr.f32.gmra.mrb[0].mxu0 %v584
    %v652 = vpop.f32.mrb[0].mxu0
    %v653 = vadd.f32 0.0, %v652
    %v654 = vpop.f32.mrb[0].mxu0
    %655 = vdwg.mxu0
    %v656 = vadd.f32 %v165, %v653
    %v657 = vtanh.pop %v656
    %v658 = vmul.f32 %v657, 0.5
    %v659 = vadd.f32 %v658, 0.5
    %v660 = vmul.f32 %v659, %v574
    %662 = vrot.lane.b32.xlu0 %v657, 64
    %v663 = vpop.permute.xlu0 %662
    %v665 = vmul.f32 %v659, %v663
    %667 = vrot.lane.b32.xlu0 %v665, 32
    %v668 = vpop.permute.xlu0 %667
    %v670 = vadd.f32 %v660, %v668
    %v671 = vtanh.pop %v670
    %673 = vrot.lane.b32.xlu0 %v671, 64
    %v674 = vpop.permute.xlu0 %673
    %v676 = vmul.f32 %v659, %v674
    %678 = vrot.lane.b32.xlu0 %v676, 32
    %v679 = vpop.permute.xlu0 %678
    %v680 = vsel %vm195, %v679, 0
    %682 = vmatprep.subr.mxu0 0.0
    %683 = vmatpush1.msra.mxu0 %v26
    %684 = vmatprep.subr.mxu0 0.0
    %685 = vmatpush1.msra.mxu0 %v27
    %686 = vmatprep.subr.mxu0 0.0
    %687 = vmatpush1.msra.mxu0 %v28
    %688 = vmatprep.subr.mxu0 0.0
    %689 = vmatpush1.msra.mxu0 %v29
    %690 = vmatprep.subr.mxu0 0.0
    %691 = vmatpush1.msra.mxu0 0.0
    %692 = vmatprep.subr.mxu0 0.0
    %693 = vmatpush1.msra.mxu0 0.0
    %694 = vmatprep.subr.mxu0 0.0
    %695 = vmatpush1.msra.mxu0 0.0
    %696 = vmatprep.subr.mxu0 0.0
    %697 = vmatpush1.msra.mxu0 0.0
    %698 = vmatprep.subr.mxu0 0.0
    %699 = vmatpush1.msra.mxu0 0.0
    %700 = vmatprep.subr.mxu0 0.0
    %701 = vmatpush1.msra.mxu0 0.0
    %702 = vmatprep.subr.mxu0 0.0
    %703 = vmatpush1.msra.mxu0 0.0
    %704 = vmatprep.subr.mxu0 0.0
    %705 = vmatpush1.msra.mxu0 0.0
    %706 = vmatprep.subr.mxu0 0.0
    %707 = vmatpush1.msra.mxu0 0.0
    %708 = vmatprep.subr.mxu0 0.0
    %709 = vmatpush1.msra.mxu0 0.0
    %710 = vmatprep.subr.mxu0 0.0
    %711 = vmatpush1.msra.mxu0 0.0
    %712 = vmatprep.subr.mxu0 0.0
    %713 = vmatpush1.msra.mxu0 0.0
    %714 = vmatprep.subr.mxu0 0.0
    %715 = vmatpush1.msra.mxu0 0.0
    %716 = vmatprep.subr.mxu0 0.0
    %717 = vmatpush1.msra.mxu0 0.0
    %718 = vmatprep.subr.mxu0 0.0
    %719 = vmatpush1.msra.mxu0 0.0
    %720 = vmatprep.subr.mxu0 0.0
    %721 = vmatpush1.msra.mxu0 0.0
    %722 = vmatprep.subr.mxu0 0.0
    %723 = vmatpush1.msra.mxu0 0.0
    %724 = vmatprep.subr.mxu0 0.0
    %725 = vmatpush1.msra.mxu0 0.0
    %726 = vmatprep.subr.mxu0 0.0
    %727 = vmatpush1.msra.mxu0 0.0
    %728 = vmatprep.subr.mxu0 0.0
    %729 = vmatpush1.msra.mxu0 0.0
    %730 = vmatprep.subr.mxu0 0.0
    %731 = vmatpush1.msra.mxu0 0.0
    %732 = vmatprep.subr.mxu0 0.0
    %733 = vmatpush1.msra.mxu0 0.0
    %734 = vmatprep.subr.mxu0 0.0
    %735 = vmatpush1.msra.mxu0 0.0
    %736 = vmatprep.subr.mxu0 0.0
    %737 = vmatpush1.msra.mxu0 0.0
    %738 = vmatprep.subr.mxu0 0.0
    %739 = vmatpush1.msra.mxu0 0.0
    %740 = vmatprep.subr.mxu0 0.0
    %741 = vmatpush1.msra.mxu0 0.0
    %742 = vmatprep.subr.mxu0 0.0
    %743 = vmatpush1.msra.mxu0 0.0
    %744 = vmatprep.subr.mxu0 0.0
    %745 = vmatpush1.msra.mxu0 0.0
    %746 = vmatprep.mubr.f32.mxu0 0.0
    %747 = vmatmul.mubr.f32.gmra.mrb[0].mxu0 %v680
    %v748 = vpop.f32.mrb[0].mxu0
    %v749 = vadd.f32 0.0, %v748
    %v750 = vpop.f32.mrb[0].mxu0
    %751 = vdwg.mxu0
    %v752 = vadd.f32 %v170, %v749
    %v753 = vtanh.pop %v752
    %v754 = vmul.f32 %v753, 0.5
    %v755 = vadd.f32 %v754, 0.5
    %v756 = vmul.f32 %v755, %v670
    %758 = vrot.lane.b32.xlu0 %v753, 64
    %v759 = vpop.permute.xlu0 %758
    %v761 = vmul.f32 %v755, %v759
    %763 = vrot.lane.b32.xlu0 %v761, 32
    %v764 = vpop.permute.xlu0 %763
    %v766 = vadd.f32 %v756, %v764
    %v767 = vtanh.pop %v766
    %769 = vrot.lane.b32.xlu0 %v767, 64
    %v770 = vpop.permute.xlu0 %769
    %v772 = vmul.f32 %v755, %v770
    %774 = vrot.lane.b32.xlu0 %v772, 32
    %v775 = vpop.permute.xlu0 %774
    %v776 = vsel %vm195, %v775, 0
    %778 = vmatprep.subr.mxu0 0.0
    %779 = vmatpush1.msra.mxu0 %v26
    %780 = vmatprep.subr.mxu0 0.0
    %781 = vmatpush1.msra.mxu0 %v27
    %782 = vmatprep.subr.mxu0 0.0
    %783 = vmatpush1.msra.mxu0 %v28
    %784 = vmatprep.subr.mxu0 0.0
    %785 = vmatpush1.msra.mxu0 %v29
    %786 = vmatprep.subr.mxu0 0.0
    %787 = vmatpush1.msra.mxu0 0.0
    %788 = vmatprep.subr.mxu0 0.0
    %789 = vmatpush1.msra.mxu0 0.0
    %790 = vmatprep.subr.mxu0 0.0
    %791 = vmatpush1.msra.mxu0 0.0
    %792 = vmatprep.subr.mxu0 0.0
    %793 = vmatpush1.msra.mxu0 0.0
    %794 = vmatprep.subr.mxu0 0.0
    %795 = vmatpush1.msra.mxu0 0.0
    %796 = vmatprep.subr.mxu0 0.0
    %797 = vmatpush1.msra.mxu0 0.0
    %798 = vmatprep.subr.mxu0 0.0
    %799 = vmatpush1.msra.mxu0 0.0
    %800 = vmatprep.subr.mxu0 0.0
    %801 = vmatpush1.msra.mxu0 0.0
    %802 = vmatprep.subr.mxu0 0.0
    %803 = vmatpush1.msra.mxu0 0.0
    %804 = vmatprep.subr.mxu0 0.0
    %805 = vmatpush1.msra.mxu0 0.0
    %806 = vmatprep.subr.mxu0 0.0
    %807 = vmatpush1.msra.mxu0 0.0
    %808 = vmatprep.subr.mxu0 0.0
    %809 = vmatpush1.msra.mxu0 0.0
    %810 = vmatprep.subr.mxu0 0.0
    %811 = vmatpush1.msra.mxu0 0.0
    %812 = vmatprep.subr.mxu0 0.0
    %813 = vmatpush1.msra.mxu0 0.0
    %814 = vmatprep.subr.mxu0 0.0
    %815 = vmatpush1.msra.mxu0 0.0
    %816 = vmatprep.subr.mxu0 0.0
    %817 = vmatpush1.msra.mxu0 0.0
    %818 = vmatprep.subr.mxu0 0.0
    %819 = vmatpush1.msra.mxu0 0.0
    %820 = vmatprep.subr.mxu0 0.0
    %821 = vmatpush1.msra.mxu0 0.0
    %822 = vmatprep.subr.mxu0 0.0
    %823 = vmatpush1.msra.mxu0 0.0
    %824 = vmatprep.subr.mxu0 0.0
    %825 = vmatpush1.msra.mxu0 0.0
    %826 = vmatprep.subr.mxu0 0.0
    %827 = vmatpush1.msra.mxu0 0.0
    %828 = vmatprep.subr.mxu0 0.0
    %829 = vmatpush1.msra.mxu0 0.0
    %830 = vmatprep.subr.mxu0 0.0
    %831 = vmatpush1.msra.mxu0 0.0
    %832 = vmatprep.subr.mxu0 0.0
    %833 = vmatpush1.msra.mxu0 0.0
    %834 = vmatprep.subr.mxu0 0.0
    %835 = vmatpush1.msra.mxu0 0.0
    %836 = vmatprep.subr.mxu0 0.0
    %837 = vmatpush1.msra.mxu0 0.0
    %838 = vmatprep.subr.mxu0 0.0
    %839 = vmatpush1.msra.mxu0 0.0
    %840 = vmatprep.subr.mxu0 0.0
    %841 = vmatpush1.msra.mxu0 0.0
    %842 = vmatprep.mubr.f32.mxu0 0.0
    %843 = vmatmul.mubr.f32.gmra.mrb[0].mxu0 %v776
    %v844 = vpop.f32.mrb[0].mxu0
    %v845 = vadd.f32 0.0, %v844
    %v846 = vpop.f32.mrb[0].mxu0
    %847 = vdwg.mxu0
    %v848 = vadd.f32 %v175, %v845
    %v849 = vtanh.pop %v848
    %v850 = vmul.f32 %v849, 0.5
    %v851 = vadd.f32 %v850, 0.5
    %v852 = vmul.f32 %v851, %v766
    %854 = vrot.lane.b32.xlu0 %v849, 64
    %v855 = vpop.permute.xlu0 %854
    %v857 = vmul.f32 %v851, %v855
    %859 = vrot.lane.b32.xlu0 %v857, 32
    %v860 = vpop.permute.xlu0 %859
    %v862 = vadd.f32 %v852, %v860
    %v863 = vtanh.pop %v862
    %865 = vrot.lane.b32.xlu0 %v863, 64
    %v866 = vpop.permute.xlu0 %865
    %v868 = vmul.f32 %v851, %v866
    %v869 = vld [vmem:[#allocation2 + $0x30] sm:$0xff]
    %v870 = vld [vmem:[#allocation2 + $0x38] sm:$0xff]
    %v871 = vld [vmem:[#allocation2 + $0x40] sm:$0xff]
    %v872 = vld [vmem:[#allocation2 + $0x48] sm:$0xff]
    %v873 = vld [vmem:[#allocation2 + $0x50] sm:$0x1]
    %v874 = vld [vmem:[#allocation2 + $0x58] sm:$0xff]
    %v875 = vld [vmem:[#allocation2 + $0x60] sm:$0xff]
    %v876 = vld [vmem:[#allocation2 + $0x68] sm:$0xff]
    %v877 = vld [vmem:[#allocation2 + $0x70] sm:$0xff]
    %v878 = vld [vmem:[#allocation2 + $0x78] sm:$0xff]
    %v879 = vld [vmem:[#allocation2 + $0x80] sm:$0xff]
    %v880 = vld [vmem:[#allocation2 + $0x88] sm:$0xff]
    %v881 = vld [vmem:[#allocation2 + $0x90] sm:$0xff]
    %v882 = vld [vmem:[#allocation2 + $0x98] sm:$0xff]
    %v883 = vld [vmem:[#allocation2 + $0xa0] sm:$0xff]
    %v884 = vld [vmem:[#allocation2 + $0xa8] sm:$0xff]
    %v885 = vld [vmem:[#allocation2 + $0xb0] sm:$0xff]
    %v886 = vld [vmem:[#allocation2 + $0xb8] sm:$0xff]
    %v887 = vld [vmem:[#allocation2 + $0xc0] sm:$0xff]
    %v888 = vld [vmem:[#allocation2 + $0xc8] sm:$0xff]
    %v889 = vld [vmem:[#allocation2 + $0xd0] sm:$0xff]
    %v890 = vld [vmem:[#allocation2 + $0xd8] sm:$0x1]
    %v891 = vlaneseq
    %v892 = vshrl.u32 %v891, 7
    %v893 = vsub.s32 0, %v892
    %v894 = vrot.slane %v873, %v893
    %896 = vrot.lane.b32.xlu0 %v868, 32
    %v897 = vpop.permute.xlu0 %896
    %v898 = vsel %vm195, %v897, 0
    %900 = vmatprep.subr.mxu0 0.0
    %901 = vmatpush1.msra.mxu0 %v869
    %902 = vmatprep.subr.mxu0 0.0
    %903 = vmatpush1.msra.mxu0 %v870
    %904 = vmatprep.subr.mxu0 0.0
    %905 = vmatpush1.msra.mxu0 %v871
    %906 = vmatprep.subr.mxu0 0.0
    %907 = vmatpush1.msra.mxu0 %v872
    %908 = vmatprep.subr.mxu0 0.0
    %909 = vmatpush1.msra.mxu0 0.0
    %910 = vmatprep.subr.mxu0 0.0
    %911 = vmatpush1.msra.mxu0 0.0
    %912 = vmatprep.subr.mxu0 0.0
    %913 = vmatpush1.msra.mxu0 0.0
    %914 = vmatprep.subr.mxu0 0.0
    %915 = vmatpush1.msra.mxu0 0.0
    %916 = vmatprep.subr.mxu0 0.0
    %917 = vmatpush1.msra.mxu0 0.0
    %918 = vmatprep.subr.mxu0 0.0
    %919 = vmatpush1.msra.mxu0 0.0
    %920 = vmatprep.subr.mxu0 0.0
    %921 = vmatpush1.msra.mxu0 0.0
    %922 = vmatprep.subr.mxu0 0.0
    %923 = vmatpush1.msra.mxu0 0.0
    %924 = vmatprep.subr.mxu0 0.0
    %925 = vmatpush1.msra.mxu0 0.0
    %926 = vmatprep.subr.mxu0 0.0
    %927 = vmatpush1.msra.mxu0 0.0
    %928 = vmatprep.subr.mxu0 0.0
    %929 = vmatpush1.msra.mxu0 0.0
    %930 = vmatprep.subr.mxu0 0.0
    %931 = vmatpush1.msra.mxu0 0.0
    %932 = vmatprep.subr.mxu0 0.0
    %933 = vmatpush1.msra.mxu0 0.0
    %934 = vmatprep.subr.mxu0 0.0
    %935 = vmatpush1.msra.mxu0 0.0
    %936 = vmatprep.subr.mxu0 0.0
    %937 = vmatpush1.msra.mxu0 0.0
    %938 = vmatprep.subr.mxu0 0.0
    %939 = vmatpush1.msra.mxu0 0.0
    %940 = vmatprep.subr.mxu0 0.0
    %941 = vmatpush1.msra.mxu0 0.0
    %942 = vmatprep.subr.mxu0 0.0
    %943 = vmatpush1.msra.mxu0 0.0
    %944 = vmatprep.subr.mxu0 0.0
    %945 = vmatpush1.msra.mxu0 0.0
    %946 = vmatprep.subr.mxu0 0.0
    %947 = vmatpush1.msra.mxu0 0.0
    %948 = vmatprep.subr.mxu0 0.0
    %949 = vmatpush1.msra.mxu0 0.0
    %950 = vmatprep.subr.mxu0 0.0
    %951 = vmatpush1.msra.mxu0 0.0
    %952 = vmatprep.subr.mxu0 0.0
    %953 = vmatpush1.msra.mxu0 0.0
    %954 = vmatprep.subr.mxu0 0.0
    %955 = vmatpush1.msra.mxu0 0.0
    %956 = vmatprep.subr.mxu0 0.0
    %957 = vmatpush1.msra.mxu0 0.0
    %958 = vmatprep.subr.mxu0 0.0
    %959 = vmatpush1.msra.mxu0 0.0
    %960 = vmatprep.subr.mxu0 0.0
    %961 = vmatpush1.msra.mxu0 0.0
    %962 = vmatprep.subr.mxu0 0.0
    %963 = vmatpush1.msra.mxu0 0.0
    %964 = vmatprep.mubr.f32.mxu0 0.0
    %965 = vmatmul.mubr.f32.gmra.mrb[0].mxu0 %v898
    %v966 = vpop.f32.mrb[0].mxu0
    %v967 = vadd.f32 %v894, %v966
    %v968 = vpop.f32.mrb[0].mxu0
    %969 = vdwg.mxu0
    %v970 = vmax.f32 %v967, 0.0
    %v971 = vlaneseq
    %v972 = vshrl.u32 %v971, 7
    %v973 = vsub.s32 0, %v972
    %v974 = vrot.slane %v890, %v973
    %975 = vmatprep.subr.mxu0 0.0
    %976 = vmatpush1.msra.mxu0 %v874
    %977 = vmatprep.subr.mxu0 0.0
    %978 = vmatpush1.msra.mxu0 %v875
    %979 = vmatprep.subr.mxu0 0.0
    %980 = vmatpush1.msra.mxu0 %v876
    %981 = vmatprep.subr.mxu0 0.0
    %982 = vmatpush1.msra.mxu0 %v877
    %983 = vmatprep.subr.mxu0 0.0
    %984 = vmatpush1.msra.mxu0 %v878
    %985 = vmatprep.subr.mxu0 0.0
    %986 = vmatpush1.msra.mxu0 %v879
    %987 = vmatprep.subr.mxu0 0.0
    %988 = vmatpush1.msra.mxu0 %v880
    %989 = vmatprep.subr.mxu0 0.0
    %990 = vmatpush1.msra.mxu0 %v881
    %991 = vmatprep.subr.mxu0 0.0
    %992 = vmatpush1.msra.mxu0 %v882
    %993 = vmatprep.subr.mxu0 0.0
    %994 = vmatpush1.msra.mxu0 %v883
    %995 = vmatprep.subr.mxu0 0.0
    %996 = vmatpush1.msra.mxu0 %v884
    %997 = vmatprep.subr.mxu0 0.0
    %998 = vmatpush1.msra.mxu0 %v885
    %999 = vmatprep.subr.mxu0 0.0
    %1000 = vmatpush1.msra.mxu0 %v886
    %1001 = vmatprep.subr.mxu0 0.0
    %1002 = vmatpush1.msra.mxu0 %v887
    %1003 = vmatprep.subr.mxu0 0.0
    %1004 = vmatpush1.msra.mxu0 %v888
    %1005 = vmatprep.subr.mxu0 0.0
    %1006 = vmatpush1.msra.mxu0 %v889
    %1007 = vmatprep.subr.mxu0 0.0
    %1008 = vmatpush1.msra.mxu0 0.0
    %1009 = vmatprep.subr.mxu0 0.0
    %1010 = vmatpush1.msra.mxu0 0.0
    %1011 = vmatprep.subr.mxu0 0.0
    %1012 = vmatpush1.msra.mxu0 0.0
    %1013 = vmatprep.subr.mxu0 0.0
    %1014 = vmatpush1.msra.mxu0 0.0
    %1015 = vmatprep.subr.mxu0 0.0
    %1016 = vmatpush1.msra.mxu0 0.0
    %1017 = vmatprep.subr.mxu0 0.0
    %1018 = vmatpush1.msra.mxu0 0.0
    %1019 = vmatprep.subr.mxu0 0.0
    %1020 = vmatpush1.msra.mxu0 0.0
    %1021 = vmatprep.subr.mxu0 0.0
    %1022 = vmatpush1.msra.mxu0 0.0
    %1023 = vmatprep.subr.mxu0 0.0
    %1024 = vmatpush1.msra.mxu0 0.0
    %1025 = vmatprep.subr.mxu0 0.0
    %1026 = vmatpush1.msra.mxu0 0.0
    %1027 = vmatprep.subr.mxu0 0.0
    %1028 = vmatpush1.msra.mxu0 0.0
    %1029 = vmatprep.subr.mxu0 0.0
    %1030 = vmatpush1.msra.mxu0 0.0
    %1031 = vmatprep.subr.mxu0 0.0
    %1032 = vmatpush1.msra.mxu0 0.0
    %1033 = vmatprep.subr.mxu0 0.0
    %1034 = vmatpush1.msra.mxu0 0.0
    %1035 = vmatprep.subr.mxu0 0.0
    %1036 = vmatpush1.msra.mxu0 0.0
    %1037 = vmatprep.subr.mxu0 0.0
    %1038 = vmatpush1.msra.mxu0 0.0
    %1039 = vmatprep.mubr.f32.mxu0 0.0
    %1040 = vmatmul.mubr.f32.gmra.mrb[0].mxu0 %v970
    %v1041 = vpop.f32.mrb[0].mxu0
    %v1042 = vadd.f32 %v974, %v1041
    %v1043 = vpop.f32.mrb[0].mxu0
    %1044 = vdwg.mxu0
    %1045 = vst [vmem:[#allocation5] sm:$0xff] %v1042
    // Predicated region
    $region14: #{tpu_custom_call.1} parent=1 // pred_check
      _
    $region15: #{tpu_custom_call.1} parent=1 // pred_check_branch
      %1047 = sbr.rel (0) target = $region17
    $region16: #{tpu_custom_call.1} parent=1 // pred_region
      %s1049 = ssub.s32 128, 128
      %1050 = vsyncadd [#allocation4], %s1049
      %s1052 = sshll.u32 [#allocation5], 4
      %s1053 = int_to_ptr.vmem [resolvable:$true] %s1052
      %1055 = dma.vmem_to_hbm [thread:$0]  %s1053, 128, %s2, [#allocation4]
    $region17: #{tpu_custom_call.1} parent=1 // pred_fallthru
      _
    // Predicated region
    $region18: #{tpu_custom_call.1} parent=1 // pred_check
      _
    $region19: #{tpu_custom_call.1} parent=1 // pred_check_branch
      %1057 = sbr.rel (0) target = $region21
    $region20: #{tpu_custom_call.1} parent=1 // pred_region
      %1058 = dma.done [#allocation4], 128
    $region21: #{tpu_custom_call.1} parent=1 // pred_fallthru
      _
    %1059 = vsyncpa [#allocation3], 1
    %1060 = vsyncpa [#allocation4], 1

</llo_original>
